<compile_context>
chip_gen: v7x
topology: tpu7x:2x2x1
jax: 0.10.0
libtpu: 0.0.40
codegen_flags: <defaults>
</compile_context>

<pallas_src>
import functools

import jax
import jax.numpy as jnp
from jax.experimental import pallas as pl
from jax.experimental.pallas import tpu as pltpu

EPS = 1e-5

# Conservative per-call budgets that fit every generation (v7x has only 64 MiB
# physical VMEM per TensorCore; its scoped default is 32 MiB).
_TILE_BUDGET_BYTES = 32 * 1024 * 1024   # tiles (double-buffered) + f32 temps
_VMEM_LIMIT_BYTES = 48 * 1024 * 1024    # scoped VMEM limit requested from Mosaic
_MAX_BLOCK_ROWS = 1024


def _round_up(a, b):
    return (a + b - 1) // b * b


def _auto_block_rows(R, D, itemsize):
    """Largest row tile that fits the VMEM budget, sublane-packing aligned."""
    # f32 -> rows pack 8/sublane-group, bf16 -> 16, int8/fp8 -> 32.
    pack = 8 * max(1, 4 // itemsize)
    # Footprint per row: 2x(input + output) tiles in x dtype (double buffering)
    # plus ~2 f32 temporaries inside the kernel.
    per_row_bytes = 4 * D * itemsize + 2 * D * 4
    br = max(pack, _TILE_BUDGET_BYTES // per_row_bytes)
    br = min(br, _MAX_BLOCK_ROWS, _round_up(R, pack))
    br = max(pack, (br // pack) * pack)
    return int(br)


def _moments(x):
    """One-pass mean/var over the last dim (single pair of XLU reductions)."""
    d = x.shape[-1]
    inv_d = 1.0 / d
    s = jnp.sum(x, axis=-1, keepdims=True)
    ss = jnp.sum(x * x, axis=-1, keepdims=True)
    mean = s * inv_d
    var = jnp.maximum(ss * inv_d - mean * mean, 0.0)  # guard tiny negatives
    return mean, var


def _ln_kernel_bias(x_ref, w_ref, b_ref, o_ref):
    # x_ref: (tm, D) rows; w_ref/b_ref: (1, D), broadcast across rows.
    x = x_ref[...].astype(jnp.float32)
    mean, var = _moments(x)
    inv = jax.lax.rsqrt(var + EPS)
    w = w_ref[...].astype(jnp.float32)
    b = b_ref[...].astype(jnp.float32)
    o_ref[...] = ((x - mean) * inv * w + b).astype(o_ref.dtype)


def _ln_kernel_nobias(x_ref, w_ref, o_ref):
    x = x_ref[...].astype(jnp.float32)
    mean, var = _moments(x)
    inv = jax.lax.rsqrt(var + EPS)
    w = w_ref[...].astype(jnp.float32)
    o_ref[...] = ((x - mean) * inv * w).astype(o_ref.dtype)


@functools.partial(jax.jit, static_argnames=("block_rows",))
def layer_norm(x, weight, bias=None, *, block_rows=None):
    """LayerNorm over the last dim of x; weight (D,), optional bias (D,)."""
    D = x.shape[-1]
    orig_shape = x.shape
    xr = x.reshape(-1, D)                                   # (R, D)
    R = xr.shape[0]
    itemsize = jnp.dtype(x.dtype).itemsize

    if block_rows is None:
        block_rows = _auto_block_rows(R, D, itemsize)

    grid_rows = pl.cdiv(R, block_rows)
    R_pad = grid_rows * block_rows
    if R_pad != R:
        # Zero-pad the trailing tile; padded rows produce finite garbage that
        # is sliced off below. Keeps block_rows large for arbitrary R.
        xr = jnp.pad(xr, ((0, R_pad - R), (0, 0)))

    w2 = weight.reshape(1, D)
    has_bias = bias is not None

    row_spec = pl.BlockSpec((block_rows, D), lambda i: (i, 0))
    par_spec = pl.BlockSpec((1, D), lambda i: (0, 0))

    n_param_inputs = 2 if has_bias else 1
    cost = pl.CostEstimate(
        flops=8 * R_pad * D,
        transcendentals=R_pad,
        bytes_accessed=2 * R_pad * D * itemsize
        + n_param_inputs * D * jnp.dtype(weight.dtype).itemsize,
    )

    kernel = _ln_kernel_bias if has_bias else _ln_kernel_nobias
    in_specs = [row_spec, par_spec] + ([par_spec] if has_bias else [])
    operands = (xr, w2, bias.reshape(1, D)) if has_bias else (xr, w2)

    out = pl.pallas_call(
        kernel,
        out_shape=jax.ShapeDtypeStruct((R_pad, D), x.dtype),
        grid_spec=pltpu.PrefetchScalarGridSpec(
            num_scalar_prefetch=0,
            grid=(grid_rows,),
            in_specs=in_specs,
            out_specs=row_spec,
        ),
        compiler_params=pltpu.CompilerParams(
            dimension_semantics=("parallel",),      # megacore-shardable on v7x
            vmem_limit_bytes=_VMEM_LIMIT_BYTES,
        ),
        cost_estimate=cost,
    )(*operands)

    if R_pad != R:
        out = out[:R]
    return out.reshape(orig_shape)


def _ref_layer_norm(x, weight, bias):
    mean = jnp.mean(x, axis=-1, keepdims=True)
    var = jnp.mean((x - mean) ** 2, axis=-1, keepdims=True)
    y = (x - mean) / jnp.sqrt(var + EPS) * weight
    if bias is not None:
        y = y + bias
    return y


if __name__ == "__main__":
    key = jax.random.PRNGKey(0)
    B, T, D = 2, 8, 32

    x = jax.random.normal(key, (B, T, D), dtype=jnp.float32)

    # Deterministic params matching the module __init__ (ones / zeros).
    weight = jnp.ones((D,), dtype=jnp.float32)
    bias = jnp.zeros((D,), dtype=jnp.float32)      # module built with bias=True

    # bias=True path
    y = jax.block_until_ready(layer_norm(x, weight, bias))
    ref = _ref_layer_norm(x, weight, bias)
    assert jnp.allclose(y, ref, atol=1e-4, rtol=1e-4), "mismatch vs reference"

    # bias=False path (dedicated no-bias kernel)
    y_nb = jax.block_until_ready(layer_norm(x, weight, None))
    ref_nb = _ref_layer_norm(x, weight, None)
    assert jnp.allclose(y_nb, ref_nb, atol=1e-4, rtol=1e-4), "mismatch (no bias)"

    # Ragged row-count path: exercises cdiv grid + padded trailing tile.
    x2 = jax.random.normal(jax.random.PRNGKey(1), (3, 5, D), dtype=jnp.float32)
    y2 = jax.block_until_ready(layer_norm(x2, weight, bias))
    ref2 = _ref_layer_norm(x2, weight, bias)
    assert jnp.allclose(y2, ref2, atol=1e-4, rtol=1e-4), "mismatch (padded tile)"

    print("KERNEL_OK")
</pallas_src>

<mosaic_0001>
module attributes {stable_mosaic.version = 11 : i64} {
  func.func @_ln_kernel_bias(%arg0: i32, %arg1: memref<16x32xf32, #tpu.memory_space<vmem>>, %arg2: memref<1x32xf32, #tpu.memory_space<vmem>>, %arg3: memref<1x32xf32, #tpu.memory_space<vmem>>, %arg4: memref<16x32xf32, #tpu.memory_space<vmem>>) attributes {dimension_semantics = [#tpu.dimension_semantics<parallel>], iteration_bounds = array<i64: 1>, scalar_prefetch = 0 : i64, scratch_operands = 0 : i64, tpu.core_type = #tpu.core_type<tc>, window_params = [{transform_indices = @transform_0, window_bounds = array<i64: 16, 32>}, {pipeline_mode = #tpu.pipeline_mode<synchronous>, transform_indices = @transform_1, window_bounds = array<i64: 1, 32>}, {pipeline_mode = #tpu.pipeline_mode<synchronous>, transform_indices = @transform_2, window_bounds = array<i64: 1, 32>}, {transform_indices = @transform_3, window_bounds = array<i64: 16, 32>}]} {
    %c0 = arith.constant 0 : index
    %c0_0 = arith.constant 0 : index
    %0 = vector.load %arg1[%c0, %c0_0] : memref<16x32xf32, #tpu.memory_space<vmem>>, vector<16x32xf32>
    %cst = arith.constant dense<0.000000e+00> : vector<16xf32>
    %1 = vector.multi_reduction <add>, %0, %cst [1] : vector<16x32xf32> to vector<16xf32>
    %2 = vector.shape_cast %1 : vector<16xf32> to vector<16x1xf32>
    %3 = arith.mulf %0, %0 : vector<16x32xf32>
    %cst_1 = arith.constant dense<0.000000e+00> : vector<16xf32>
    %4 = vector.multi_reduction <add>, %3, %cst_1 [1] : vector<16x32xf32> to vector<16xf32>
    %5 = vector.shape_cast %4 : vector<16xf32> to vector<16x1xf32>
    %cst_2 = arith.constant 3.125000e-02 : f32
    %6 = vector.broadcast %cst_2 : f32 to vector<16x1xf32>
    %7 = arith.mulf %2, %6 : vector<16x1xf32>
    %cst_3 = arith.constant 3.125000e-02 : f32
    %8 = vector.broadcast %cst_3 : f32 to vector<16x1xf32>
    %9 = arith.mulf %5, %8 : vector<16x1xf32>
    %10 = arith.mulf %7, %7 : vector<16x1xf32>
    %11 = arith.subf %9, %10 : vector<16x1xf32>
    %cst_4 = arith.constant 0.000000e+00 : f32
    %12 = vector.broadcast %cst_4 : f32 to vector<16x1xf32>
    %13 = arith.maximumf %11, %12 : vector<16x1xf32>
    %cst_5 = arith.constant 9.99999974E-6 : f32
    %14 = vector.broadcast %cst_5 : f32 to vector<16x1xf32>
    %15 = arith.addf %13, %14 : vector<16x1xf32>
    %16 = math.rsqrt %15 : vector<16x1xf32>
    %c0_6 = arith.constant 0 : index
    %c0_7 = arith.constant 0 : index
    %17 = vector.load %arg2[%c0_6, %c0_7] : memref<1x32xf32, #tpu.memory_space<vmem>>, vector<1x32xf32>
    %c0_8 = arith.constant 0 : index
    %c0_9 = arith.constant 0 : index
    %18 = vector.load %arg3[%c0_8, %c0_9] : memref<1x32xf32, #tpu.memory_space<vmem>>, vector<1x32xf32>
    %19 = vector.broadcast %7 : vector<16x1xf32> to vector<16x32xf32>
    %20 = arith.subf %0, %19 : vector<16x32xf32>
    %21 = vector.broadcast %16 : vector<16x1xf32> to vector<16x32xf32>
    %22 = arith.mulf %20, %21 : vector<16x32xf32>
    %23 = vector.broadcast %17 : vector<1x32xf32> to vector<16x32xf32>
    %24 = arith.mulf %22, %23 : vector<16x32xf32>
    %25 = vector.broadcast %18 : vector<1x32xf32> to vector<16x32xf32>
    %26 = arith.addf %24, %25 : vector<16x32xf32>
    %c0_10 = arith.constant 0 : index
    %c0_11 = arith.constant 0 : index
    %27 = vector.load %arg4[%c0_10, %c0_11] : memref<16x32xf32, #tpu.memory_space<vmem>>, vector<16x32xf32>
    tpu.vector_store %arg4[%c0_10, %c0_11], %26 {strides = array<i32>} : memref<16x32xf32, #tpu.memory_space<vmem>>, vector<16x32xf32>,
    return
  }
  func.func @transform_0(%arg0: i32) -> (i32, i32) {
    %c0_i32 = arith.constant 0 : i32
    %c0_i32_0 = arith.constant 0 : i32
    return %arg0, %c0_i32 : i32, i32
  }
  func.func @transform_1(%arg0: i32) -> (i32, i32) {
    %c0_i32 = arith.constant 0 : i32
    %c0_i32_0 = arith.constant 0 : i32
    %c0_i32_1 = arith.constant 0 : i32
    return %c0_i32, %c0_i32_0 : i32, i32
  }
  func.func @transform_2(%arg0: i32) -> (i32, i32) {
    %c0_i32 = arith.constant 0 : i32
    %c0_i32_0 = arith.constant 0 : i32
    %c0_i32_1 = arith.constant 0 : i32
    return %c0_i32, %c0_i32_0 : i32, i32
  }
  func.func @transform_3(%arg0: i32) -> (i32, i32) {
    %c0_i32 = arith.constant 0 : i32
    %c0_i32_0 = arith.constant 0 : i32
    return %arg0, %c0_i32 : i32, i32
  }
}

</mosaic_0001>

<llo_original>
// kernel: layer_norm.1
$region0: #{layer_norm.1}
  #allocation0 [shape = 'u32[]', space=smem, size = 0x4, offset = 0x4, fixed_abs, tag = 'smem constant byte address 0x4 - core index']
  #allocation1 [shape = 'u32[144,128]{1,0:T(1,128)}', space=vmem, size = 0x12000, scoped, tag = 'internal scratch']
  %s0 = inlined_call_operand.hbm [shape: f32[16,32], index: 0, kind: input, shape index: {}]
  %s1 = inlined_call_operand.vmem [shape: f32[1,32], index: 1, kind: input, shape index: {}]
  %s2 = inlined_call_operand.vmem [shape: f32[1,32], index: 2, kind: input, shape index: {}]
  %s3 = inlined_call_operand.hbm [shape: f32[16,32], index: 3, kind: output, shape index: {}]
  %s4 = sld [smem:[#allocation0]]
  $region26: #{layer_norm.1} parent=0
    _
  %s6 = ssub.s32 1, %s4
  %s7 = scalar_select 0, %s6, %s4
  $region1: #{layer_norm.1} parent=0
    #allocation2 [shape = 'u8[8192]{0}', space=vmem, size = 0x2000, scoped, tag = 'input window, operand 0, single buffered']
    #allocation3 [shape = 's32[1]{0}', space=sflag, size = 0x4, scoped, tag = 'scoped memory for layer_norm.1']
    #allocation4 [shape = 's32[1]{0}', space=sflag, size = 0x4, scoped, tag = 'scoped memory for layer_norm.1']
    #allocation5 [shape = 'u8[8192]{0}', space=vmem, size = 0x2000, scoped, tag = 'output window, operand 0, single buffered']
    %8 = vsyncpa [#allocation3], 0
    %9 = vsyncpa [#allocation4], 0
    // Predicated region
    $region2: #{layer_norm.1} parent=1 // pred_check
      _
    $region3: #{layer_norm.1} parent=1 // pred_check_branch
      %11 = sbr.rel (0) target = $region5
    $region4: #{layer_norm.1} parent=1 // pred_region
      %s13 = ssub.s32 256, 256
      %14 = vsyncadd [#allocation3], %s13
      %s15 = sshll.u32 [#allocation2], 4
      %s16 = int_to_ptr.vmem [resolvable:$true] %s15
      %21 = dma.hbm_to_vmem [thread:$0]  %s0, 256, %s16, [#allocation3], 128, 128, 8
    $region5: #{layer_norm.1} parent=1 // pred_fallthru
      _
    // Predicated region
    $region6: #{layer_norm.1} parent=1 // pred_check
      _
    $region7: #{layer_norm.1} parent=1 // pred_check_branch
      %23 = sbr.rel (0) target = $region9
    $region8: #{layer_norm.1} parent=1 // pred_region
      _
    $region9: #{layer_norm.1} parent=1 // pred_fallthru
      _
    // Predicated region
    $region10: #{layer_norm.1} parent=1 // pred_check
      _
    $region11: #{layer_norm.1} parent=1 // pred_check_branch
      %25 = sbr.rel (0) target = $region13
    $region12: #{layer_norm.1} parent=1 // pred_region
      _
    $region13: #{layer_norm.1} parent=1 // pred_fallthru
      _
    // Predicated region
    $region14: #{layer_norm.1} parent=1 // pred_check
      _
    $region15: #{layer_norm.1} parent=1 // pred_check_branch
      %27 = sbr.rel (0) target = $region17
    $region16: #{layer_norm.1} parent=1 // pred_region
      %28 = dma.done [#allocation3], 256
    $region17: #{layer_norm.1} parent=1 // pred_fallthru
      _
    %v29 = vld [vmem:[#allocation2] sm:$0xff]
    %v30 = vld [vmem:[#allocation2 + $0x8] sm:$0xff]
    %vm31 = vcmask 261120
    %v32 = vsel %vm31, %v29, 0.0
    %33 = vadd.xlane.f32.xlu0 %v32
    %v34 = vpop.xlane.xlu0 %33
    %v35 = vsel %vm31, %v30, 0.0
    %36 = vadd.xlane.f32.xlu0 %v35
    %v37 = vpop.xlane.xlu0 %36
    %v38 = vmul.f32 %v29, %v29
    %v39 = vmul.f32 %v30, %v30
    %v40 = vsel %vm31, %v38, 0.0
    %41 = vadd.xlane.f32.xlu0 %v40
    %v42 = vpop.xlane.xlu0 %41
    %v43 = vsel %vm31, %v39, 0.0
    %44 = vadd.xlane.f32.xlu0 %v43
    %v45 = vpop.xlane.xlu0 %44
    %v46 = vmul.f32 %v34, 0.03125
    %v47 = vmul.f32 %v37, 0.03125
    %v48 = vmul.f32 %v42, 0.03125
    %v49 = vmul.f32 %v45, 0.03125
    %v50 = vmul.f32 %v46, %v46
    %v51 = vmul.f32 %v47, %v47
    %v52 = vsub.f32 %v48, %v50
    %v53 = vsub.f32 %v49, %v51
    %v54 = vmax.f32 %v52, 0.0
    %v55 = vmax.f32 %v53, 0.0
    %v56 = vadd.f32 %v54, 1e-05
    %v57 = vadd.f32 %v55, 1e-05
    %v58 = vrsqrt.pop %v56
    %v59 = vrsqrt.pop %v57
    %v60 = vld [vmem:[%s1] sm:$0x1]
    %v61 = vld [vmem:[%s2] sm:$0x1]
    %v62 = vsub.f32 %v29, %v46
    %v63 = vsub.f32 %v30, %v47
    %v64 = vmul.f32 %v62, %v58
    %v65 = vmul.f32 %v63, %v59
    %v67 = vlaneseq
    %v68 = vshrl.u32 %v67, 7
    %v69 = vsub.s32 0, %v68
    %v70 = vrot.slane %v60, %v69
    %v72 = vmul.f32 %v64, %v70
    %v73 = vmul.f32 %v65, %v70
    %v75 = vlaneseq
    %v76 = vshrl.u32 %v75, 7
    %v77 = vsub.s32 0, %v76
    %v78 = vrot.slane %v61, %v77
    %v80 = vadd.f32 %v72, %v78
    %v81 = vadd.f32 %v73, %v78
    %82 = vst.msk [vmem:[#allocation5] sm:$0xff] %vm31, %v80
    %83 = vst.msk [vmem:[#allocation5 + $0x8] sm:$0xff] %vm31, %v81
    // Predicated region
    $region18: #{layer_norm.1} parent=1 // pred_check
      _
    $region19: #{layer_norm.1} parent=1 // pred_check_branch
      %85 = sbr.rel (0) target = $region21
    $region20: #{layer_norm.1} parent=1 // pred_region
      %s87 = ssub.s32 256, 256
      %88 = vsyncadd [#allocation4], %s87
      %s89 = sshll.u32 [#allocation5], 4
      %s90 = int_to_ptr.vmem [resolvable:$true] %s89
      %95 = dma.vmem_to_hbm [thread:$0]  %s90, 256, %s3, [#allocation4], 128, 128, 8
    $region21: #{layer_norm.1} parent=1 // pred_fallthru
      _
    // Predicated region
    $region22: #{layer_norm.1} parent=1 // pred_check
      _
    $region23: #{layer_norm.1} parent=1 // pred_check_branch
      %97 = sbr.rel (0) target = $region25
    $region24: #{layer_norm.1} parent=1 // pred_region
      %98 = dma.done [#allocation4], 256
    $region25: #{layer_norm.1} parent=1 // pred_fallthru
      _
    %99 = vsyncpa [#allocation3], 1
    %100 = vsyncpa [#allocation4], 1

</llo_original>
